<compile_context>
chip_gen: v7x
topology: tpu7x:2x2x1
jax: 0.10.0
libtpu: 0.0.40
codegen_flags: <defaults>
</compile_context>

<pallas_src>
import functools

import jax
import jax.numpy as jnp
from jax import lax
from jax.experimental import pallas as pl
from jax.experimental.pallas import tpu as pltpu

H_REAL = 100          # nn.Linear hidden features in the PyTorch module
H_PAD = 128           # lane-padded hidden dim
A_PAD = 128           # lane-padded action (output) dim
LEAKY_SLOPE = 0.01    # nn.LeakyReLU default
LN_EPS = 1e-5         # nn.LayerNorm default


def _round_up(n, m):
    return (n + m - 1) // m * m


def _mlp_kernel(x_ref,
                w1_ref, b1_ref, g1_ref, be1_ref,
                w2_ref, b2_ref, g2_ref, be2_ref,
                wpi_ref, bpi_ref,
                logit_ref, lgsm_ref,
                *, a_real, mm_dtype):
    x = x_ref[...]  # (TB, D) float32

    # Mask of the "real" hidden lanes (first H_REAL of H_PAD).
    h_mask = lax.broadcasted_iota(jnp.int32, (1, H_PAD), 1) < H_REAL
    inv_h = jnp.float32(1.0 / H_REAL)

    def linear_act_ln(h_in, w_ref, b_ref, g_ref, be_ref):
        # Linear (MXU, f32 accumulation) + bias. Pad columns of W and pad
        # lanes of b are zero, so pad lanes of h are exactly 0 here.
        h = jnp.dot(h_in.astype(mm_dtype), w_ref[...].astype(mm_dtype),
                    preferred_element_type=jnp.float32) + b_ref[...]
        # LeakyReLU (keeps pad lanes at 0).
        h = jnp.where(h >= 0, h, LEAKY_SLOPE * h)
        # LayerNorm over the H_REAL real features only (biased variance,
        # matching PyTorch). Pad lanes are zero so the plain sum is correct
        # for the mean; the variance uses a masked diff.
        mean = jnp.sum(h, axis=-1, keepdims=True) * inv_h
        diff = jnp.where(h_mask, h - mean, 0.0)
        var = jnp.sum(diff * diff, axis=-1, keepdims=True) * inv_h
        h_hat = diff * lax.rsqrt(var + LN_EPS)
        # gamma/beta are zero in pad lanes -> output pad lanes stay exactly 0.
        return h_hat * g_ref[...] + be_ref[...]

    h = linear_act_ln(x, w1_ref, b1_ref, g1_ref, be1_ref)
    h = linear_act_ln(h, w2_ref, b2_ref, g2_ref, be2_ref)

    # Policy head. Pad columns of Wpi / pad lanes of bpi are zero.
    logits = jnp.dot(h.astype(mm_dtype), wpi_ref[...].astype(mm_dtype),
                     preferred_element_type=jnp.float32) + bpi_ref[...]
    logit_ref[...] = logits  # full 128-lane (unmasked) store; sliced outside

    # log_softmax over the a_real real action lanes only.
    a_mask = lax.broadcasted_iota(jnp.int32, (1, A_PAD), 1) < a_real
    masked_logits = jnp.where(a_mask, logits, -jnp.inf)
    m = jnp.max(masked_logits, axis=-1, keepdims=True)
    shifted = logits - m
    sum_exp = jnp.sum(jnp.where(a_mask, jnp.exp(shifted), 0.0),
                      axis=-1, keepdims=True)
    lgsm_ref[...] = shifted - jnp.log(sum_exp)


def network_forward(x, params, *, tile_b=256, matmul_dtype=jnp.float32):
    """x: [B, D] float32. params: real-shaped weights (see init_params).

    Returns (pi_logit, lg_sm), each [B, num_action] float32.
    Set matmul_dtype=jnp.bfloat16 on v6e/v7x for higher MXU throughput
    (accumulation stays f32).
    """
    x = jnp.asarray(x, jnp.float32)
    B, D = x.shape
    a_real = int(params["wpi"].shape[1])

    # ---- one-time lane-padding of the (tiny) parameters ----
    def pad2(a, rows, cols):
        a = jnp.asarray(a, jnp.float32)
        return jnp.pad(a, ((0, rows - a.shape[0]), (0, cols - a.shape[1])))

    def pad_vec(v, cols):
        v = jnp.asarray(v, jnp.float32).reshape(1, -1)
        return jnp.pad(v, ((0, 0), (0, cols - v.shape[1])))

    w1 = pad2(params["w1"], D, H_PAD)
    b1 = pad_vec(params["b1"], H_PAD)
    g1 = pad_vec(params["g1"], H_PAD)
    be1 = pad_vec(params["be1"], H_PAD)
    w2 = pad2(params["w2"], H_PAD, H_PAD)
    b2 = pad_vec(params["b2"], H_PAD)
    g2 = pad_vec(params["g2"], H_PAD)
    be2 = pad_vec(params["be2"], H_PAD)
    wpi = pad2(params["wpi"], H_PAD, A_PAD)
    bpi = pad_vec(params["bpi"], A_PAD)

    # ---- batch tiling ----
    TB = min(tile_b, _round_up(B, 8))       # sublane-aligned batch tile
    B_pad = _round_up(B, TB)
    if B_pad != B:
        x = jnp.pad(x, ((0, B_pad - B), (0, 0)))
    grid = (B_pad // TB,)

    def batch_map(i):
        return (i, 0)

    def const_map(i):
        return (0, 0)

    in_specs = [
        pl.BlockSpec((TB, D), batch_map),          # x  (pipelined over batch)
        pl.BlockSpec((D, H_PAD), const_map),       # w1 (VMEM-resident)
        pl.BlockSpec((1, H_PAD), const_map),       # b1
        pl.BlockSpec((1, H_PAD), const_map),       # g1
        pl.BlockSpec((1, H_PAD), const_map),       # be1
        pl.BlockSpec((H_PAD, H_PAD), const_map),   # w2
        pl.BlockSpec((1, H_PAD), const_map),       # b2
        pl.BlockSpec((1, H_PAD), const_map),       # g2
        pl.BlockSpec((1, H_PAD), const_map),       # be2
        pl.BlockSpec((H_PAD, A_PAD), const_map),   # wpi
        pl.BlockSpec((1, A_PAD), const_map),       # bpi
    ]
    out_specs = (
        pl.BlockSpec((TB, A_PAD), batch_map),      # pi_logit (lane-dense)
        pl.BlockSpec((TB, A_PAD), batch_map),      # lg_sm    (lane-dense)
    )

    kernel = functools.partial(_mlp_kernel, a_real=a_real, mm_dtype=matmul_dtype)

    logit_pad, lgsm_pad = pl.pallas_call(
        kernel,
        out_shape=(
            jax.ShapeDtypeStruct((B_pad, A_PAD), jnp.float32),
            jax.ShapeDtypeStruct((B_pad, A_PAD), jnp.float32),
        ),
        grid=grid,
        in_specs=in_specs,
        out_specs=out_specs,
        compiler_params=pltpu.CompilerParams(
            dimension_semantics=("parallel",)),    # split batch across TCs on v7x
    )(x, w1, b1, g1, be1, w2, b2, g2, be2, wpi, bpi)

    return logit_pad[:B, :a_real], lgsm_pad[:B, :a_real]


def init_params(key, ip_dim, num_action):
    """Deterministic synthetic init (PyTorch-like uniform fan-in scaling).

    Shapes match the PyTorch module (hidden=100, unpadded)."""
    ks = jax.random.split(key, 6)
    H = H_REAL

    def lin_init(kw, kb, fan_in, fan_out):
        bound = 1.0 / jnp.sqrt(jnp.float32(fan_in))
        w = jax.random.uniform(kw, (fan_in, fan_out), jnp.float32, -bound, bound)
        b = jax.random.uniform(kb, (fan_out,), jnp.float32, -bound, bound)
        return w, b

    w1, b1 = lin_init(ks[0], ks[1], ip_dim, H)
    w2, b2 = lin_init(ks[2], ks[3], H, H)
    wpi, bpi = lin_init(ks[4], ks[5], H, num_action)

    return {
        "w1": w1, "b1": b1,
        "g1": jnp.ones((H,), jnp.float32), "be1": jnp.zeros((H,), jnp.float32),
        "w2": w2, "b2": b2,
        "g2": jnp.ones((H,), jnp.float32), "be2": jnp.zeros((H,), jnp.float32),
        "wpi": wpi, "bpi": bpi,
    }


def _reference(x, p):
    """Pure-JAX f32 reference matching the PyTorch module."""
    def ln(h, g, b):
        mean = jnp.mean(h, axis=-1, keepdims=True)
        var = jnp.mean(jnp.square(h - mean), axis=-1, keepdims=True)
        return (h - mean) / jnp.sqrt(var + LN_EPS) * g + b

    def lrelu(h):
        return jnp.where(h >= 0, h, LEAKY_SLOPE * h)

    h = ln(lrelu(x @ p["w1"] + p["b1"]), p["g1"], p["be1"])
    h = ln(lrelu(h @ p["w2"] + p["b2"]), p["g2"], p["be2"])
    logits = h @ p["wpi"] + p["bpi"]
    return logits, jax.nn.log_softmax(logits, axis=-1)


if __name__ == "__main__":
    key = jax.random.PRNGKey(0)
    k_param, k_x = jax.random.split(key)

    B, ip_dim, num_action = 8, 32, 5
    params = init_params(k_param, ip_dim, num_action)
    x = jax.random.normal(k_x, (B, ip_dim), jnp.float32)

    # f32 path (exact semantics) — check against the pure-JAX reference.
    pi_logit, lg_sm = network_forward(x, params)
    jax.block_until_ready((pi_logit, lg_sm))

    ref_logit, ref_lgsm = _reference(x, params)
    assert pi_logit.shape == (B, num_action)
    assert lg_sm.shape == (B, num_action)
    assert jnp.allclose(pi_logit, ref_logit, atol=1e-4, rtol=1e-4)
    assert jnp.allclose(lg_sm, ref_lgsm, atol=1e-4, rtol=1e-4)
    assert jnp.allclose(jnp.sum(jnp.exp(lg_sm), axis=-1), 1.0, atol=1e-5)

    # bf16-matmul path (v6e/v7x MXU throughput option) — compile & run only.
    out_bf16 = network_forward(x, params, matmul_dtype=jnp.bfloat16)
    jax.block_until_ready(out_bf16)

    print("KERNEL_OK")
</pallas_src>

<mosaic_0001>
module attributes {stable_mosaic.version = 11 : i64} {
  func.func @_mlp_kernel(%arg0: i32, %arg1: memref<8x32xf32, #tpu.memory_space<vmem>>, %arg2: memref<32x128xf32, #tpu.memory_space<vmem>>, %arg3: memref<1x128xf32, #tpu.memory_space<vmem>>, %arg4: memref<1x128xf32, #tpu.memory_space<vmem>>, %arg5: memref<1x128xf32, #tpu.memory_space<vmem>>, %arg6: memref<128x128xf32, #tpu.memory_space<vmem>>, %arg7: memref<1x128xf32, #tpu.memory_space<vmem>>, %arg8: memref<1x128xf32, #tpu.memory_space<vmem>>, %arg9: memref<1x128xf32, #tpu.memory_space<vmem>>, %arg10: memref<128x128xf32, #tpu.memory_space<vmem>>, %arg11: memref<1x128xf32, #tpu.memory_space<vmem>>, %arg12: memref<8x128xf32, #tpu.memory_space<vmem>>, %arg13: memref<8x128xf32, #tpu.memory_space<vmem>>) attributes {dimension_semantics = [#tpu.dimension_semantics<parallel>], iteration_bounds = array<i64: 1>, scalar_prefetch = 0 : i64, scratch_operands = 0 : i64, tpu.core_type = #tpu.core_type<tc>, window_params = [{transform_indices = @transform_0, window_bounds = array<i64: 8, 32>}, {pipeline_mode = #tpu.pipeline_mode<synchronous>, transform_indices = @transform_1, window_bounds = array<i64: 32, 128>}, {pipeline_mode = #tpu.pipeline_mode<synchronous>, transform_indices = @transform_2, window_bounds = array<i64: 1, 128>}, {pipeline_mode = #tpu.pipeline_mode<synchronous>, transform_indices = @transform_3, window_bounds = array<i64: 1, 128>}, {pipeline_mode = #tpu.pipeline_mode<synchronous>, transform_indices = @transform_4, window_bounds = array<i64: 1, 128>}, {pipeline_mode = #tpu.pipeline_mode<synchronous>, transform_indices = @transform_5, window_bounds = array<i64: 128, 128>}, {pipeline_mode = #tpu.pipeline_mode<synchronous>, transform_indices = @transform_6, window_bounds = array<i64: 1, 128>}, {pipeline_mode = #tpu.pipeline_mode<synchronous>, transform_indices = @transform_7, window_bounds = array<i64: 1, 128>}, {pipeline_mode = #tpu.pipeline_mode<synchronous>, transform_indices = @transform_8, window_bounds = array<i64: 1, 128>}, {pipeline_mode = #tpu.pipeline_mode<synchronous>, transform_indices = @transform_9, window_bounds = array<i64: 128, 128>}, {pipeline_mode = #tpu.pipeline_mode<synchronous>, transform_indices = @transform_10, window_bounds = array<i64: 1, 128>}, {transform_indices = @transform_11, window_bounds = array<i64: 8, 128>}, {transform_indices = @transform_12, window_bounds = array<i64: 8, 128>}]} {
    %c0 = arith.constant 0 : index
    %c0_0 = arith.constant 0 : index
    %0 = vector.load %arg1[%c0, %c0_0] : memref<8x32xf32, #tpu.memory_space<vmem>>, vector<8x32xf32>
    %1 = tpu.iota {dimensions = array<i32: 1>} : vector<1x128xi32>
    %c100_i32 = arith.constant 100 : i32
    %2 = vector.broadcast %c100_i32 : i32 to vector<1x128xi32>
    %3 = arith.cmpi slt, %1, %2 : vector<1x128xi32>
    %c0_1 = arith.constant 0 : index
    %c0_2 = arith.constant 0 : index
    %4 = vector.load %arg2[%c0_1, %c0_2] : memref<32x128xf32, #tpu.memory_space<vmem>>, vector<32x128xf32>
    %cst = arith.constant dense<0.000000e+00> : vector<8x128xf32>
    %5 = tpu.matmul %0, %4, %cst {dimension_numbers = #tpu.dot_dimension_numbers<[1], [0], [0], [1], [0, 0, 1, 1], [], []>} : vector<8x32xf32>, vector<32x128xf32>, vector<8x128xf32> -> vector<8x128xf32>
    %c0_3 = arith.constant 0 : index
    %c0_4 = arith.constant 0 : index
    %6 = vector.load %arg3[%c0_3, %c0_4] : memref<1x128xf32, #tpu.memory_space<vmem>>, vector<1x128xf32>
    %7 = vector.broadcast %6 : vector<1x128xf32> to vector<8x128xf32>
    %8 = arith.addf %5, %7 : vector<8x128xf32>
    %cst_5 = arith.constant 0.000000e+00 : f32
    %9 = vector.broadcast %cst_5 : f32 to vector<8x128xf32>
    %10 = arith.cmpf oge, %8, %9 : vector<8x128xf32>
    %cst_6 = arith.constant 0.00999999977 : f32
    %11 = vector.broadcast %cst_6 : f32 to vector<8x128xf32>
    %12 = arith.mulf %11, %8 : vector<8x128xf32>
    %13 = arith.select %10, %8, %12 : vector<8x128xi1>, vector<8x128xf32>
    %cst_7 = arith.constant dense<0.000000e+00> : vector<8xf32>
    %14 = vector.multi_reduction <add>, %13, %cst_7 [1] : vector<8x128xf32> to vector<8xf32>
    %15 = vector.shape_cast %14 : vector<8xf32> to vector<8x1xf32>
    %cst_8 = arith.constant 0.00999999977 : f32
    %16 = vector.broadcast %cst_8 : f32 to vector<8x1xf32>
    %17 = arith.mulf %15, %16 : vector<8x1xf32>
    %18 = vector.broadcast %17 : vector<8x1xf32> to vector<8x128xf32>
    %19 = arith.subf %13, %18 : vector<8x128xf32>
    %cst_9 = arith.constant 0.000000e+00 : f32
    %20 = vector.shape_cast %3 : vector<1x128xi1> to vector<1x128xi1>
    %21 = vector.broadcast %20 : vector<1x128xi1> to vector<8x128xi1>
    %22 = vector.broadcast %cst_9 : f32 to vector<8x128xf32>
    %23 = arith.select %21, %19, %22 : vector<8x128xi1>, vector<8x128xf32>
    %24 = arith.mulf %23, %23 : vector<8x128xf32>
    %cst_10 = arith.constant dense<0.000000e+00> : vector<8xf32>
    %25 = vector.multi_reduction <add>, %24, %cst_10 [1] : vector<8x128xf32> to vector<8xf32>
    %26 = vector.shape_cast %25 : vector<8xf32> to vector<8x1xf32>
    %cst_11 = arith.constant 0.00999999977 : f32
    %27 = vector.broadcast %cst_11 : f32 to vector<8x1xf32>
    %28 = arith.mulf %26, %27 : vector<8x1xf32>
    %cst_12 = arith.constant 9.99999974E-6 : f32
    %29 = vector.broadcast %cst_12 : f32 to vector<8x1xf32>
    %30 = arith.addf %28, %29 : vector<8x1xf32>
    %31 = math.rsqrt %30 : vector<8x1xf32>
    %32 = vector.broadcast %31 : vector<8x1xf32> to vector<8x128xf32>
    %33 = arith.mulf %23, %32 : vector<8x128xf32>
    %c0_13 = arith.constant 0 : index
    %c0_14 = arith.constant 0 : index
    %34 = vector.load %arg4[%c0_13, %c0_14] : memref<1x128xf32, #tpu.memory_space<vmem>>, vector<1x128xf32>
    %35 = vector.broadcast %34 : vector<1x128xf32> to vector<8x128xf32>
    %36 = arith.mulf %33, %35 : vector<8x128xf32>
    %c0_15 = arith.constant 0 : index
    %c0_16 = arith.constant 0 : index
    %37 = vector.load %arg5[%c0_15, %c0_16] : memref<1x128xf32, #tpu.memory_space<vmem>>, vector<1x128xf32>
    %38 = vector.broadcast %37 : vector<1x128xf32> to vector<8x128xf32>
    %39 = arith.addf %36, %38 : vector<8x128xf32>
    %c0_17 = arith.constant 0 : index
    %c0_18 = arith.constant 0 : index
    %40 = vector.load %arg6[%c0_17, %c0_18] : memref<128x128xf32, #tpu.memory_space<vmem>>, vector<128x128xf32>
    %cst_19 = arith.constant dense<0.000000e+00> : vector<8x128xf32>
    %41 = tpu.matmul %39, %40, %cst_19 {dimension_numbers = #tpu.dot_dimension_numbers<[1], [0], [0], [1], [0, 0, 1, 1], [], []>} : vector<8x128xf32>, vector<128x128xf32>, vector<8x128xf32> -> vector<8x128xf32>
    %c0_20 = arith.constant 0 : index
    %c0_21 = arith.constant 0 : index
    %42 = vector.load %arg7[%c0_20, %c0_21] : memref<1x128xf32, #tpu.memory_space<vmem>>, vector<1x128xf32>
    %43 = vector.broadcast %42 : vector<1x128xf32> to vector<8x128xf32>
    %44 = arith.addf %41, %43 : vector<8x128xf32>
    %cst_22 = arith.constant 0.000000e+00 : f32
    %45 = vector.broadcast %cst_22 : f32 to vector<8x128xf32>
    %46 = arith.cmpf oge, %44, %45 : vector<8x128xf32>
    %cst_23 = arith.constant 0.00999999977 : f32
    %47 = vector.broadcast %cst_23 : f32 to vector<8x128xf32>
    %48 = arith.mulf %47, %44 : vector<8x128xf32>
    %49 = arith.select %46, %44, %48 : vector<8x128xi1>, vector<8x128xf32>
    %cst_24 = arith.constant dense<0.000000e+00> : vector<8xf32>
    %50 = vector.multi_reduction <add>, %49, %cst_24 [1] : vector<8x128xf32> to vector<8xf32>
    %51 = vector.shape_cast %50 : vector<8xf32> to vector<8x1xf32>
    %cst_25 = arith.constant 0.00999999977 : f32
    %52 = vector.broadcast %cst_25 : f32 to vector<8x1xf32>
    %53 = arith.mulf %51, %52 : vector<8x1xf32>
    %54 = vector.broadcast %53 : vector<8x1xf32> to vector<8x128xf32>
    %55 = arith.subf %49, %54 : vector<8x128xf32>
    %cst_26 = arith.constant 0.000000e+00 : f32
    %56 = vector.shape_cast %3 : vector<1x128xi1> to vector<1x128xi1>
    %57 = vector.broadcast %56 : vector<1x128xi1> to vector<8x128xi1>
    %58 = vector.broadcast %cst_26 : f32 to vector<8x128xf32>
    %59 = arith.select %57, %55, %58 : vector<8x128xi1>, vector<8x128xf32>
    %60 = arith.mulf %59, %59 : vector<8x128xf32>
    %cst_27 = arith.constant dense<0.000000e+00> : vector<8xf32>
    %61 = vector.multi_reduction <add>, %60, %cst_27 [1] : vector<8x128xf32> to vector<8xf32>
    %62 = vector.shape_cast %61 : vector<8xf32> to vector<8x1xf32>
    %cst_28 = arith.constant 0.00999999977 : f32
    %63 = vector.broadcast %cst_28 : f32 to vector<8x1xf32>
    %64 = arith.mulf %62, %63 : vector<8x1xf32>
    %cst_29 = arith.constant 9.99999974E-6 : f32
    %65 = vector.broadcast %cst_29 : f32 to vector<8x1xf32>
    %66 = arith.addf %64, %65 : vector<8x1xf32>
    %67 = math.rsqrt %66 : vector<8x1xf32>
    %68 = vector.broadcast %67 : vector<8x1xf32> to vector<8x128xf32>
    %69 = arith.mulf %59, %68 : vector<8x128xf32>
    %c0_30 = arith.constant 0 : index
    %c0_31 = arith.constant 0 : index
    %70 = vector.load %arg8[%c0_30, %c0_31] : memref<1x128xf32, #tpu.memory_space<vmem>>, vector<1x128xf32>
    %71 = vector.broadcast %70 : vector<1x128xf32> to vector<8x128xf32>
    %72 = arith.mulf %69, %71 : vector<8x128xf32>
    %c0_32 = arith.constant 0 : index
    %c0_33 = arith.constant 0 : index
    %73 = vector.load %arg9[%c0_32, %c0_33] : memref<1x128xf32, #tpu.memory_space<vmem>>, vector<1x128xf32>
    %74 = vector.broadcast %73 : vector<1x128xf32> to vector<8x128xf32>
    %75 = arith.addf %72, %74 : vector<8x128xf32>
    %c0_34 = arith.constant 0 : index
    %c0_35 = arith.constant 0 : index
    %76 = vector.load %arg10[%c0_34, %c0_35] : memref<128x128xf32, #tpu.memory_space<vmem>>, vector<128x128xf32>
    %cst_36 = arith.constant dense<0.000000e+00> : vector<8x128xf32>
    %77 = tpu.matmul %75, %76, %cst_36 {dimension_numbers = #tpu.dot_dimension_numbers<[1], [0], [0], [1], [0, 0, 1, 1], [], []>} : vector<8x128xf32>, vector<128x128xf32>, vector<8x128xf32> -> vector<8x128xf32>
    %c0_37 = arith.constant 0 : index
    %c0_38 = arith.constant 0 : index
    %78 = vector.load %arg11[%c0_37, %c0_38] : memref<1x128xf32, #tpu.memory_space<vmem>>, vector<1x128xf32>
    %79 = vector.broadcast %78 : vector<1x128xf32> to vector<8x128xf32>
    %80 = arith.addf %77, %79 : vector<8x128xf32>
    %c0_39 = arith.constant 0 : index
    %c0_40 = arith.constant 0 : index
    %81 = vector.load %arg12[%c0_39, %c0_40] : memref<8x128xf32, #tpu.memory_space<vmem>>, vector<8x128xf32>
    tpu.vector_store %arg12[%c0_39, %c0_40], %80 {strides = array<i32>} : memref<8x128xf32, #tpu.memory_space<vmem>>, vector<8x128xf32>,
    %82 = tpu.iota {dimensions = array<i32: 1>} : vector<1x128xi32>
    %c5_i32 = arith.constant 5 : i32
    %83 = vector.broadcast %c5_i32 : i32 to vector<1x128xi32>
    %84 = arith.cmpi slt, %82, %83 : vector<1x128xi32>
    %cst_41 = arith.constant 0xFF800000 : f32
    %85 = vector.shape_cast %84 : vector<1x128xi1> to vector<1x128xi1>
    %86 = vector.broadcast %85 : vector<1x128xi1> to vector<8x128xi1>
    %87 = vector.broadcast %cst_41 : f32 to vector<8x128xf32>
    %88 = arith.select %86, %80, %87 : vector<8x128xi1>, vector<8x128xf32>
    %cst_42 = arith.constant dense<0xFF800000> : vector<8xf32>
    %89 = vector.multi_reduction <maximumf>, %88, %cst_42 [1] : vector<8x128xf32> to vector<8xf32>
    %90 = vector.shape_cast %89 : vector<8xf32> to vector<8x1xf32>
    %91 = vector.broadcast %90 : vector<8x1xf32> to vector<8x128xf32>
    %92 = arith.subf %80, %91 : vector<8x128xf32>
    %93 = math.exp %92 : vector<8x128xf32>
    %cst_43 = arith.constant 0.000000e+00 : f32
    %94 = vector.shape_cast %84 : vector<1x128xi1> to vector<1x128xi1>
    %95 = vector.broadcast %94 : vector<1x128xi1> to vector<8x128xi1>
    %96 = vector.broadcast %cst_43 : f32 to vector<8x128xf32>
    %97 = arith.select %95, %93, %96 : vector<8x128xi1>, vector<8x128xf32>
    %cst_44 = arith.constant dense<0.000000e+00> : vector<8xf32>
    %98 = vector.multi_reduction <add>, %97, %cst_44 [1] : vector<8x128xf32> to vector<8xf32>
    %99 = vector.shape_cast %98 : vector<8xf32> to vector<8x1xf32>
    %100 = math.log %99 : vector<8x1xf32>
    %101 = vector.broadcast %100 : vector<8x1xf32> to vector<8x128xf32>
    %102 = arith.subf %92, %101 : vector<8x128xf32>
    %c0_45 = arith.constant 0 : index
    %c0_46 = arith.constant 0 : index
    %103 = vector.load %arg13[%c0_45, %c0_46] : memref<8x128xf32, #tpu.memory_space<vmem>>, vector<8x128xf32>
    tpu.vector_store %arg13[%c0_45, %c0_46], %102 {strides = array<i32>} : memref<8x128xf32, #tpu.memory_space<vmem>>, vector<8x128xf32>,
    return
  }
  func.func @transform_0(%arg0: i32) -> (i32, i32) {
    %c0_i32 = arith.constant 0 : i32
    %c0_i32_0 = arith.constant 0 : i32
    return %arg0, %c0_i32 : i32, i32
  }
  func.func @transform_1(%arg0: i32) -> (i32, i32) {
    %c0_i32 = arith.constant 0 : i32
    %c0_i32_0 = arith.constant 0 : i32
    %c0_i32_1 = arith.constant 0 : i32
    return %c0_i32, %c0_i32_0 : i32, i32
  }
  func.func @transform_2(%arg0: i32) -> (i32, i32) {
    %c0_i32 = arith.constant 0 : i32
    %c0_i32_0 = arith.constant 0 : i32
    %c0_i32_1 = arith.constant 0 : i32
    return %c0_i32, %c0_i32_0 : i32, i32
  }
  func.func @transform_3(%arg0: i32) -> (i32, i32) {
    %c0_i32 = arith.constant 0 : i32
    %c0_i32_0 = arith.constant 0 : i32
    %c0_i32_1 = arith.constant 0 : i32
    return %c0_i32, %c0_i32_0 : i32, i32
  }
  func.func @transform_4(%arg0: i32) -> (i32, i32) {
    %c0_i32 = arith.constant 0 : i32
    %c0_i32_0 = arith.constant 0 : i32
    %c0_i32_1 = arith.constant 0 : i32
    return %c0_i32, %c0_i32_0 : i32, i32
  }
  func.func @transform_5(%arg0: i32) -> (i32, i32) {
    %c0_i32 = arith.constant 0 : i32
    %c0_i32_0 = arith.constant 0 : i32
    %c0_i32_1 = arith.constant 0 : i32
    return %c0_i32, %c0_i32_0 : i32, i32
  }
  func.func @transform_6(%arg0: i32) -> (i32, i32) {
    %c0_i32 = arith.constant 0 : i32
    %c0_i32_0 = arith.constant 0 : i32
    %c0_i32_1 = arith.constant 0 : i32
    return %c0_i32, %c0_i32_0 : i32, i32
  }
  func.func @transform_7(%arg0: i32) -> (i32, i32) {
    %c0_i32 = arith.constant 0 : i32
    %c0_i32_0 = arith.constant 0 : i32
    %c0_i32_1 = arith.constant 0 : i32
    return %c0_i32, %c0_i32_0 : i32, i32
  }
  func.func @transform_8(%arg0: i32) -> (i32, i32) {
    %c0_i32 = arith.constant 0 : i32
    %c0_i32_0 = arith.constant 0 : i32
    %c0_i32_1 = arith.constant 0 : i32
    return %c0_i32, %c0_i32_0 : i32, i32
  }
  func.func @transform_9(%arg0: i32) -> (i32, i32) {
    %c0_i32 = arith.constant 0 : i32
    %c0_i32_0 = arith.constant 0 : i32
    %c0_i32_1 = arith.constant 0 : i32
    return %c0_i32, %c0_i32_0 : i32, i32
  }
  func.func @transform_10(%arg0: i32) -> (i32, i32) {
    %c0_i32 = arith.constant 0 : i32
    %c0_i32_0 = arith.constant 0 : i32
    %c0_i32_1 = arith.constant 0 : i32
    return %c0_i32, %c0_i32_0 : i32, i32
  }
  func.func @transform_11(%arg0: i32) -> (i32, i32) {
    %c0_i32 = arith.constant 0 : i32
    %c0_i32_0 = arith.constant 0 : i32
    return %arg0, %c0_i32 : i32, i32
  }
  func.func @transform_12(%arg0: i32) -> (i32, i32) {
    %c0_i32 = arith.constant 0 : i32
    %c0_i32_0 = arith.constant 0 : i32
    return %arg0, %c0_i32 : i32, i32
  }
}

</mosaic_0001>

<llo_original>
// kernel: tpu_custom_call.1
$region0: #{tpu_custom_call.1}
  #allocation0 [shape = 'u32[]', space=smem, size = 0x4, offset = 0x4, fixed_abs, tag = 'smem constant byte address 0x4 - core index']
  #allocation1 [shape = 'u32[144,128]{1,0:T(1,128)}', space=vmem, size = 0x12000, scoped, tag = 'internal scratch']
  %s0 = inlined_call_operand.hbm [shape: f32[8,32], index: 0, kind: input, shape index: {}]
  %s1 = inlined_call_operand.hbm [shape: f32[32,128], index: 1, kind: input, shape index: {}]
  %s2 = inlined_call_operand.vmem [shape: f32[1,128], index: 2, kind: input, shape index: {}]
  %s3 = inlined_call_operand.vmem [shape: f32[1,128], index: 3, kind: input, shape index: {}]
  %s4 = inlined_call_operand.vmem [shape: f32[1,128], index: 4, kind: input, shape index: {}]
  %s5 = inlined_call_operand.hbm [shape: f32[128,128], index: 5, kind: input, shape index: {}]
  %s6 = inlined_call_operand.vmem [shape: f32[1,128], index: 6, kind: input, shape index: {}]
  %s7 = inlined_call_operand.vmem [shape: f32[1,128], index: 7, kind: input, shape index: {}]
  %s8 = inlined_call_operand.vmem [shape: f32[1,128], index: 8, kind: input, shape index: {}]
  %s9 = inlined_call_operand.hbm [shape: f32[128,128], index: 9, kind: input, shape index: {}]
  %s10 = inlined_call_operand.vmem [shape: f32[1,128], index: 10, kind: input, shape index: {}]
  %s11 = inlined_call_operand.hbm [shape: f32[8,128], index: 11, kind: output, shape index: {0}]
  %s12 = inlined_call_operand.hbm [shape: f32[8,128], index: 12, kind: output, shape index: {1}]
  %13 = xla_tuple %s11, %s12
  %s14 = sld [smem:[#allocation0]]
  $region78: #{tpu_custom_call.1} parent=0
    _
  %s16 = ssub.s32 1, %s14
  %s17 = scalar_select 0, %s16, %s14
  $region1: #{tpu_custom_call.1} parent=0
    #allocation2 [shape = 'u8[4096]{0}', space=vmem, size = 0x1000, scoped, tag = 'input window, operand 0, single buffered']
    #allocation3 [shape = 's32[1]{0}', space=sflag, size = 0x4, scoped, tag = 'scoped memory for tpu_custom_call.1']
    #allocation4 [shape = 's32[1]{0}', space=sflag, size = 0x4, scoped, tag = 'scoped memory for tpu_custom_call.1']
    #allocation5 [shape = 'u8[16384]{0}', space=vmem, size = 0x4000, scoped, tag = 'input window, operand 1, single buffered']
    #allocation6 [shape = 's32[1]{0}', space=sflag, size = 0x4, scoped, tag = 'scoped memory for tpu_custom_call.1']
    #allocation7 [shape = 'u8[65536]{0}', space=vmem, size = 0x10000, scoped, tag = 'input window, operand 5, single buffered']
    #allocation8 [shape = 'u8[65536]{0}', space=vmem, size = 0x10000, scoped, tag = 'input window, operand 9, single buffered']
    #allocation9 [shape = 's32[1]{0}', space=sflag, size = 0x4, scoped, tag = 'scoped memory for tpu_custom_call.1']
    #allocation10 [shape = 'u8[4096]{0}', space=vmem, size = 0x1000, scoped, tag = 'output window, operand 0, single buffered']
    #allocation11 [shape = 'u8[4096]{0}', space=vmem, size = 0x1000, scoped, tag = 'output window, operand 1, single buffered']
    #allocation12 [shape = 's32[1]{0}', space=sflag, size = 0x4, scoped, tag = 'scoped memory for tpu_custom_call.1']
    %18 = vsyncpa [#allocation3], 0
    %19 = vsyncpa [#allocation6], 0
    %20 = vsyncpa [#allocation9], 0
    %21 = vsyncpa [#allocation4], 0
    %22 = vsyncpa [#allocation12], 0
    // Predicated region
    $region2: #{tpu_custom_call.1} parent=1 // pred_check
      _
    $region3: #{tpu_custom_call.1} parent=1 // pred_check_branch
      %24 = sbr.rel (0) target = $region5
    $region4: #{tpu_custom_call.1} parent=1 // pred_region
      %s26 = ssub.s32 128, 128
      %27 = vsyncadd [#allocation3], %s26
      %s29 = sshll.u32 [#allocation2], 4
      %s30 = int_to_ptr.vmem [resolvable:$true] %s29
      %32 = dma.hbm_to_vmem [thread:$0]  %s0, 128, %s30, [#allocation3]
    $region5: #{tpu_custom_call.1} parent=1 // pred_fallthru
      _
    // Predicated region
    $region6: #{tpu_custom_call.1} parent=1 // pred_check
      _
    $region7: #{tpu_custom_call.1} parent=1 // pred_check_branch
      %34 = sbr.rel (0) target = $region9
    $region8: #{tpu_custom_call.1} parent=1 // pred_region
      %s36 = ssub.s32 512, 512
      %37 = vsyncadd [#allocation6], %s36
      %s38 = sshll.u32 [#allocation5], 4
      %s39 = int_to_ptr.vmem [resolvable:$true] %s38
      %44 = dma.hbm_to_vmem [thread:$0]  %s1, 512, %s39, [#allocation6], 128, 128, 8
    $region9: #{tpu_custom_call.1} parent=1 // pred_fallthru
      _
    // Predicated region
    $region10: #{tpu_custom_call.1} parent=1 // pred_check
      _
    $region11: #{tpu_custom_call.1} parent=1 // pred_check_branch
      %46 = sbr.rel (0) target = $region13
    $region12: #{tpu_custom_call.1} parent=1 // pred_region
      _
    $region13: #{tpu_custom_call.1} parent=1 // pred_fallthru
      _
    // Predicated region
    $region14: #{tpu_custom_call.1} parent=1 // pred_check
      _
    $region15: #{tpu_custom_call.1} parent=1 // pred_check_branch
      %48 = sbr.rel (0) target = $region17
    $region16: #{tpu_custom_call.1} parent=1 // pred_region
      _
    $region17: #{tpu_custom_call.1} parent=1 // pred_fallthru
      _
    // Predicated region
    $region18: #{tpu_custom_call.1} parent=1 // pred_check
      _
    $region19: #{tpu_custom_call.1} parent=1 // pred_check_branch
      %50 = sbr.rel (0) target = $region21
    $region20: #{tpu_custom_call.1} parent=1 // pred_region
      _
    $region21: #{tpu_custom_call.1} parent=1 // pred_fallthru
      _
    // Predicated region
    $region22: #{tpu_custom_call.1} parent=1 // pred_check
      _
    $region23: #{tpu_custom_call.1} parent=1 // pred_check_branch
      %52 = sbr.rel (0) target = $region25
    $region24: #{tpu_custom_call.1} parent=1 // pred_region
      %s54 = ssub.s32 2048, 2048
      %55 = vsyncadd [#allocation6], %s54
      %s56 = sshll.u32 [#allocation7], 4
      %s57 = int_to_ptr.vmem [resolvable:$true] %s56
      %62 = dma.hbm_to_vmem [thread:$0]  %s5, 2048, %s57, [#allocation6], 128, 128, 8
    $region25: #{tpu_custom_call.1} parent=1 // pred_fallthru
      _
    // Predicated region
    $region26: #{tpu_custom_call.1} parent=1 // pred_check
      _
    $region27: #{tpu_custom_call.1} parent=1 // pred_check_branch
      %64 = sbr.rel (0) target = $region29
    $region28: #{tpu_custom_call.1} parent=1 // pred_region
      _
    $region29: #{tpu_custom_call.1} parent=1 // pred_fallthru
      _
    // Predicated region
    $region30: #{tpu_custom_call.1} parent=1 // pred_check
      _
    $region31: #{tpu_custom_call.1} parent=1 // pred_check_branch
      %66 = sbr.rel (0) target = $region33
    $region32: #{tpu_custom_call.1} parent=1 // pred_region
      _
    $region33: #{tpu_custom_call.1} parent=1 // pred_fallthru
      _
    // Predicated region
    $region34: #{tpu_custom_call.1} parent=1 // pred_check
      _
    $region35: #{tpu_custom_call.1} parent=1 // pred_check_branch
      %68 = sbr.rel (0) target = $region37
    $region36: #{tpu_custom_call.1} parent=1 // pred_region
      _
    $region37: #{tpu_custom_call.1} parent=1 // pred_fallthru
      _
    // Predicated region
    $region38: #{tpu_custom_call.1} parent=1 // pred_check
      _
    $region39: #{tpu_custom_call.1} parent=1 // pred_check_branch
      %70 = sbr.rel (0) target = $region41
    $region40: #{tpu_custom_call.1} parent=1 // pred_region
      %s72 = ssub.s32 2048, 2048
      %73 = vsyncadd [#allocation9], %s72
      %s74 = sshll.u32 [#allocation8], 4
      %s75 = int_to_ptr.vmem [resolvable:$true] %s74
      %80 = dma.hbm_to_vmem [thread:$0]  %s9, 2048, %s75, [#allocation9], 128, 128, 8
    $region41: #{tpu_custom_call.1} parent=1 // pred_fallthru
      _
    // Predicated region
    $region42: #{tpu_custom_call.1} parent=1 // pred_check
      _
    $region43: #{tpu_custom_call.1} parent=1 // pred_check_branch
      %82 = sbr.rel (0) target = $region45
    $region44: #{tpu_custom_call.1} parent=1 // pred_region
      _
    $region45: #{tpu_custom_call.1} parent=1 // pred_fallthru
      _
    // Predicated region
    $region46: #{tpu_custom_call.1} parent=1 // pred_check
      _
    $region47: #{tpu_custom_call.1} parent=1 // pred_check_branch
      %84 = sbr.rel (0) target = $region49
    $region48: #{tpu_custom_call.1} parent=1 // pred_region
      %85 = dma.done [#allocation3], 128
    $region49: #{tpu_custom_call.1} parent=1 // pred_fallthru
      _
    // Predicated region
    $region50: #{tpu_custom_call.1} parent=1 // pred_check
      _
    $region51: #{tpu_custom_call.1} parent=1 // pred_check_branch
      %87 = sbr.rel (0) target = $region53
    $region52: #{tpu_custom_call.1} parent=1 // pred_region
      %88 = dma.done [#allocation6], 512
    $region53: #{tpu_custom_call.1} parent=1 // pred_fallthru
      _
    // Predicated region
    $region54: #{tpu_custom_call.1} parent=1 // pred_check
      _
    $region55: #{tpu_custom_call.1} parent=1 // pred_check_branch
      %90 = sbr.rel (0) target = $region57
    $region56: #{tpu_custom_call.1} parent=1 // pred_region
      %91 = dma.done [#allocation6], 2048
    $region57: #{tpu_custom_call.1} parent=1 // pred_fallthru
      _
    // Predicated region
    $region58: #{tpu_custom_call.1} parent=1 // pred_check
      _
    $region59: #{tpu_custom_call.1} parent=1 // pred_check_branch
      %93 = sbr.rel (0) target = $region61
    $region60: #{tpu_custom_call.1} parent=1 // pred_region
      %94 = dma.done [#allocation9], 2048
    $region61: #{tpu_custom_call.1} parent=1 // pred_fallthru
      _
    %v95 = vld [vmem:[#allocation2] sm:$0xff]
    %v96 = vlaneseq
    %v97 = vand.u32 %v96, 127
    %vm98 = vcmp.lt.s32.totalorder %v97, 100
    %v99 = vld [vmem:[#allocation5] sm:$0xff]
    %v100 = vld [vmem:[#allocation5 + $0x8] sm:$0xff]
    %v101 = vld [vmem:[#allocation5 + $0x10] sm:$0xff]
    %v102 = vld [vmem:[#allocation5 + $0x18] sm:$0xff]
    %v103 = vld [vmem:[%s2] sm:$0x1]
    %v105 = vlaneseq
    %v106 = vshrl.u32 %v105, 7
    %v107 = vsub.s32 0, %v106
    %v108 = vrot.slane %v103, %v107
    %vm110 = vcmask 261120
    %v112 = vsel %vm110, %v95, 0
    %114 = vmatprep.subr.mxu0 0.0
    %115 = vmatpush1.msra.mxu0 %v99
    %116 = vmatprep.subr.mxu0 0.0
    %117 = vmatpush1.msra.mxu0 %v100
    %118 = vmatprep.subr.mxu0 0.0
    %119 = vmatpush1.msra.mxu0 %v101
    %120 = vmatprep.subr.mxu0 0.0
    %121 = vmatpush1.msra.mxu0 %v102
    %122 = vmatprep.subr.mxu0 0.0
    %123 = vmatpush1.msra.mxu0 0.0
    %124 = vmatprep.subr.mxu0 0.0
    %125 = vmatpush1.msra.mxu0 0.0
    %126 = vmatprep.subr.mxu0 0.0
    %127 = vmatpush1.msra.mxu0 0.0
    %128 = vmatprep.subr.mxu0 0.0
    %129 = vmatpush1.msra.mxu0 0.0
    %130 = vmatprep.subr.mxu0 0.0
    %131 = vmatpush1.msra.mxu0 0.0
    %132 = vmatprep.subr.mxu0 0.0
    %133 = vmatpush1.msra.mxu0 0.0
    %134 = vmatprep.subr.mxu0 0.0
    %135 = vmatpush1.msra.mxu0 0.0
    %136 = vmatprep.subr.mxu0 0.0
    %137 = vmatpush1.msra.mxu0 0.0
    %138 = vmatprep.subr.mxu0 0.0
    %139 = vmatpush1.msra.mxu0 0.0
    %140 = vmatprep.subr.mxu0 0.0
    %141 = vmatpush1.msra.mxu0 0.0
    %142 = vmatprep.subr.mxu0 0.0
    %143 = vmatpush1.msra.mxu0 0.0
    %144 = vmatprep.subr.mxu0 0.0
    %145 = vmatpush1.msra.mxu0 0.0
    %146 = vmatprep.subr.mxu0 0.0
    %147 = vmatpush1.msra.mxu0 0.0
    %148 = vmatprep.subr.mxu0 0.0
    %149 = vmatpush1.msra.mxu0 0.0
    %150 = vmatprep.subr.mxu0 0.0
    %151 = vmatpush1.msra.mxu0 0.0
    %152 = vmatprep.subr.mxu0 0.0
    %153 = vmatpush1.msra.mxu0 0.0
    %154 = vmatprep.subr.mxu0 0.0
    %155 = vmatpush1.msra.mxu0 0.0
    %156 = vmatprep.subr.mxu0 0.0
    %157 = vmatpush1.msra.mxu0 0.0
    %158 = vmatprep.subr.mxu0 0.0
    %159 = vmatpush1.msra.mxu0 0.0
    %160 = vmatprep.subr.mxu0 0.0
    %161 = vmatpush1.msra.mxu0 0.0
    %162 = vmatprep.subr.mxu0 0.0
    %163 = vmatpush1.msra.mxu0 0.0
    %164 = vmatprep.subr.mxu0 0.0
    %165 = vmatpush1.msra.mxu0 0.0
    %166 = vmatprep.subr.mxu0 0.0
    %167 = vmatpush1.msra.mxu0 0.0
    %168 = vmatprep.subr.mxu0 0.0
    %169 = vmatpush1.msra.mxu0 0.0
    %170 = vmatprep.subr.mxu0 0.0
    %171 = vmatpush1.msra.mxu0 0.0
    %172 = vmatprep.subr.mxu0 0.0
    %173 = vmatpush1.msra.mxu0 0.0
    %174 = vmatprep.subr.mxu0 0.0
    %175 = vmatpush1.msra.mxu0 0.0
    %176 = vmatprep.subr.mxu0 0.0
    %177 = vmatpush1.msra.mxu0 0.0
    %178 = vmatprep.mubr.f32.mxu0 0.0
    %179 = vmatmul.mubr.f32.gmra.mrb[0].mxu0 %v112
    %v180 = vpop.f32.mrb[0].mxu0
    %v181 = vadd.f32 %v108, %v180
    %v182 = vpop.f32.mrb[0].mxu0
    %183 = vdwg.mxu0
    %vm184 = vcmp.ge.f32.partialorder %v181, 0.0
    %v185 = vmul.f32 %v181, 0.01
    %v186 = vsel %vm184, %v181, %v185
    %187 = vadd.xlane.f32.xlu0 %v186
    %v188 = vpop.xlane.xlu0 %187
    %v189 = vmul.f32 %v188, 0.01
    %v190 = vsub.f32 %v186, %v189
    %v191 = vsel %vm98, 1, 0
    %vm192 = vcmp.eq.s32.totalorder %v191, 1
    %v193 = vsel %vm192, %v190, 0.0
    %v194 = vmul.f32 %v193, %v193
    %195 = vadd.xlane.f32.xlu0 %v194
    %v196 = vpop.xlane.xlu0 %195
    %v197 = vmul.f32 %v196, 0.01
    %v198 = vadd.f32 %v197, 1e-05
    %v199 = vrsqrt.pop %v198
    %v200 = vmul.f32 %v193, %v199
    %v201 = vld [vmem:[%s3] sm:$0x1]
    %v203 = vlaneseq
    %v204 = vshrl.u32 %v203, 7
    %v205 = vsub.s32 0, %v204
    %v206 = vrot.slane %v201, %v205
    %v208 = vmul.f32 %v200, %v206
    %v209 = vld [vmem:[%s4] sm:$0x1]
    %v211 = vlaneseq
    %v212 = vshrl.u32 %v211, 7
    %v213 = vsub.s32 0, %v212
    %v214 = vrot.slane %v209, %v213
    %v216 = vadd.f32 %v208, %v214
    %v217 = vld [vmem:[#allocation7] sm:$0xff]
    %v218 = vld [vmem:[#allocation7 + $0x8] sm:$0xff]
    %v219 = vld [vmem:[#allocation7 + $0x10] sm:$0xff]
    %v220 = vld [vmem:[#allocation7 + $0x18] sm:$0xff]
    %v221 = vld [vmem:[#allocation7 + $0x20] sm:$0xff]
    %v222 = vld [vmem:[#allocation7 + $0x28] sm:$0xff]
    %v223 = vld [vmem:[#allocation7 + $0x30] sm:$0xff]
    %v224 = vld [vmem:[#allocation7 + $0x38] sm:$0xff]
    %v225 = vld [vmem:[#allocation7 + $0x40] sm:$0xff]
    %v226 = vld [vmem:[#allocation7 + $0x48] sm:$0xff]
    %v227 = vld [vmem:[#allocation7 + $0x50] sm:$0xff]
    %v228 = vld [vmem:[#allocation7 + $0x58] sm:$0xff]
    %v229 = vld [vmem:[#allocation7 + $0x60] sm:$0xff]
    %v230 = vld [vmem:[#allocation7 + $0x68] sm:$0xff]
    %v231 = vld [vmem:[#allocation7 + $0x70] sm:$0xff]
    %v232 = vld [vmem:[#allocation7 + $0x78] sm:$0xff]
    %v233 = vld [vmem:[%s6] sm:$0x1]
    %v235 = vlaneseq
    %v236 = vshrl.u32 %v235, 7
    %v237 = vsub.s32 0, %v236
    %v238 = vrot.slane %v233, %v237
    %240 = vmatprep.subr.mxu0 0.0
    %241 = vmatpush1.msra.mxu0 %v217
    %242 = vmatprep.subr.mxu0 0.0
    %243 = vmatpush1.msra.mxu0 %v218
    %244 = vmatprep.subr.mxu0 0.0
    %245 = vmatpush1.msra.mxu0 %v219
    %246 = vmatprep.subr.mxu0 0.0
    %247 = vmatpush1.msra.mxu0 %v220
    %248 = vmatprep.subr.mxu0 0.0
    %249 = vmatpush1.msra.mxu0 %v221
    %250 = vmatprep.subr.mxu0 0.0
    %251 = vmatpush1.msra.mxu0 %v222
    %252 = vmatprep.subr.mxu0 0.0
    %253 = vmatpush1.msra.mxu0 %v223
    %254 = vmatprep.subr.mxu0 0.0
    %255 = vmatpush1.msra.mxu0 %v224
    %256 = vmatprep.subr.mxu0 0.0
    %257 = vmatpush1.msra.mxu0 %v225
    %258 = vmatprep.subr.mxu0 0.0
    %259 = vmatpush1.msra.mxu0 %v226
    %260 = vmatprep.subr.mxu0 0.0
    %261 = vmatpush1.msra.mxu0 %v227
    %262 = vmatprep.subr.mxu0 0.0
    %263 = vmatpush1.msra.mxu0 %v228
    %264 = vmatprep.subr.mxu0 0.0
    %265 = vmatpush1.msra.mxu0 %v229
    %266 = vmatprep.subr.mxu0 0.0
    %267 = vmatpush1.msra.mxu0 %v230
    %268 = vmatprep.subr.mxu0 0.0
    %269 = vmatpush1.msra.mxu0 %v231
    %270 = vmatprep.subr.mxu0 0.0
    %271 = vmatpush1.msra.mxu0 %v232
    %272 = vmatprep.subr.mxu0 0.0
    %273 = vmatpush1.msra.mxu0 0.0
    %274 = vmatprep.subr.mxu0 0.0
    %275 = vmatpush1.msra.mxu0 0.0
    %276 = vmatprep.subr.mxu0 0.0
    %277 = vmatpush1.msra.mxu0 0.0
    %278 = vmatprep.subr.mxu0 0.0
    %279 = vmatpush1.msra.mxu0 0.0
    %280 = vmatprep.subr.mxu0 0.0
    %281 = vmatpush1.msra.mxu0 0.0
    %282 = vmatprep.subr.mxu0 0.0
    %283 = vmatpush1.msra.mxu0 0.0
    %284 = vmatprep.subr.mxu0 0.0
    %285 = vmatpush1.msra.mxu0 0.0
    %286 = vmatprep.subr.mxu0 0.0
    %287 = vmatpush1.msra.mxu0 0.0
    %288 = vmatprep.subr.mxu0 0.0
    %289 = vmatpush1.msra.mxu0 0.0
    %290 = vmatprep.subr.mxu0 0.0
    %291 = vmatpush1.msra.mxu0 0.0
    %292 = vmatprep.subr.mxu0 0.0
    %293 = vmatpush1.msra.mxu0 0.0
    %294 = vmatprep.subr.mxu0 0.0
    %295 = vmatpush1.msra.mxu0 0.0
    %296 = vmatprep.subr.mxu0 0.0
    %297 = vmatpush1.msra.mxu0 0.0
    %298 = vmatprep.subr.mxu0 0.0
    %299 = vmatpush1.msra.mxu0 0.0
    %300 = vmatprep.subr.mxu0 0.0
    %301 = vmatpush1.msra.mxu0 0.0
    %302 = vmatprep.subr.mxu0 0.0
    %303 = vmatpush1.msra.mxu0 0.0
    %304 = vmatprep.mubr.f32.mxu0 0.0
    %305 = vmatmul.mubr.f32.gmra.mrb[0].mxu0 %v216
    %v306 = vpop.f32.mrb[0].mxu0
    %v307 = vadd.f32 %v238, %v306
    %v308 = vpop.f32.mrb[0].mxu0
    %309 = vdwg.mxu0
    %vm310 = vcmp.ge.f32.partialorder %v307, 0.0
    %v311 = vmul.f32 %v307, 0.01
    %v312 = vsel %vm310, %v307, %v311
    %313 = vadd.xlane.f32.xlu0 %v312
    %v314 = vpop.xlane.xlu0 %313
    %v315 = vmul.f32 %v314, 0.01
    %v316 = vsub.f32 %v312, %v315
    %v317 = vsel %vm192, %v316, 0.0
    %v318 = vmul.f32 %v317, %v317
    %319 = vadd.xlane.f32.xlu0 %v318
    %v320 = vpop.xlane.xlu0 %319
    %v321 = vmul.f32 %v320, 0.01
    %v322 = vadd.f32 %v321, 1e-05
    %v323 = vrsqrt.pop %v322
    %v324 = vmul.f32 %v317, %v323
    %v325 = vld [vmem:[%s7] sm:$0x1]
    %v327 = vlaneseq
    %v328 = vshrl.u32 %v327, 7
    %v329 = vsub.s32 0, %v328
    %v330 = vrot.slane %v325, %v329
    %v332 = vmul.f32 %v324, %v330
    %v333 = vld [vmem:[%s8] sm:$0x1]
    %v335 = vlaneseq
    %v336 = vshrl.u32 %v335, 7
    %v337 = vsub.s32 0, %v336
    %v338 = vrot.slane %v333, %v337
    %v340 = vadd.f32 %v332, %v338
    %v341 = vld [vmem:[#allocation8] sm:$0xff]
    %v342 = vld [vmem:[#allocation8 + $0x8] sm:$0xff]
    %v343 = vld [vmem:[#allocation8 + $0x10] sm:$0xff]
    %v344 = vld [vmem:[#allocation8 + $0x18] sm:$0xff]
    %v345 = vld [vmem:[#allocation8 + $0x20] sm:$0xff]
    %v346 = vld [vmem:[#allocation8 + $0x28] sm:$0xff]
    %v347 = vld [vmem:[#allocation8 + $0x30] sm:$0xff]
    %v348 = vld [vmem:[#allocation8 + $0x38] sm:$0xff]
    %v349 = vld [vmem:[#allocation8 + $0x40] sm:$0xff]
    %v350 = vld [vmem:[#allocation8 + $0x48] sm:$0xff]
    %v351 = vld [vmem:[#allocation8 + $0x50] sm:$0xff]
    %v352 = vld [vmem:[#allocation8 + $0x58] sm:$0xff]
    %v353 = vld [vmem:[#allocation8 + $0x60] sm:$0xff]
    %v354 = vld [vmem:[#allocation8 + $0x68] sm:$0xff]
    %v355 = vld [vmem:[#allocation8 + $0x70] sm:$0xff]
    %v356 = vld [vmem:[#allocation8 + $0x78] sm:$0xff]
    %v357 = vld [vmem:[%s10] sm:$0x1]
    %v359 = vlaneseq
    %v360 = vshrl.u32 %v359, 7
    %v361 = vsub.s32 0, %v360
    %v362 = vrot.slane %v357, %v361
    %364 = vmatprep.subr.mxu0 0.0
    %365 = vmatpush1.msra.mxu0 %v341
    %366 = vmatprep.subr.mxu0 0.0
    %367 = vmatpush1.msra.mxu0 %v342
    %368 = vmatprep.subr.mxu0 0.0
    %369 = vmatpush1.msra.mxu0 %v343
    %370 = vmatprep.subr.mxu0 0.0
    %371 = vmatpush1.msra.mxu0 %v344
    %372 = vmatprep.subr.mxu0 0.0
    %373 = vmatpush1.msra.mxu0 %v345
    %374 = vmatprep.subr.mxu0 0.0
    %375 = vmatpush1.msra.mxu0 %v346
    %376 = vmatprep.subr.mxu0 0.0
    %377 = vmatpush1.msra.mxu0 %v347
    %378 = vmatprep.subr.mxu0 0.0
    %379 = vmatpush1.msra.mxu0 %v348
    %380 = vmatprep.subr.mxu0 0.0
    %381 = vmatpush1.msra.mxu0 %v349
    %382 = vmatprep.subr.mxu0 0.0
    %383 = vmatpush1.msra.mxu0 %v350
    %384 = vmatprep.subr.mxu0 0.0
    %385 = vmatpush1.msra.mxu0 %v351
    %386 = vmatprep.subr.mxu0 0.0
    %387 = vmatpush1.msra.mxu0 %v352
    %388 = vmatprep.subr.mxu0 0.0
    %389 = vmatpush1.msra.mxu0 %v353
    %390 = vmatprep.subr.mxu0 0.0
    %391 = vmatpush1.msra.mxu0 %v354
    %392 = vmatprep.subr.mxu0 0.0
    %393 = vmatpush1.msra.mxu0 %v355
    %394 = vmatprep.subr.mxu0 0.0
    %395 = vmatpush1.msra.mxu0 %v356
    %396 = vmatprep.subr.mxu0 0.0
    %397 = vmatpush1.msra.mxu0 0.0
    %398 = vmatprep.subr.mxu0 0.0
    %399 = vmatpush1.msra.mxu0 0.0
    %400 = vmatprep.subr.mxu0 0.0
    %401 = vmatpush1.msra.mxu0 0.0
    %402 = vmatprep.subr.mxu0 0.0
    %403 = vmatpush1.msra.mxu0 0.0
    %404 = vmatprep.subr.mxu0 0.0
    %405 = vmatpush1.msra.mxu0 0.0
    %406 = vmatprep.subr.mxu0 0.0
    %407 = vmatpush1.msra.mxu0 0.0
    %408 = vmatprep.subr.mxu0 0.0
    %409 = vmatpush1.msra.mxu0 0.0
    %410 = vmatprep.subr.mxu0 0.0
    %411 = vmatpush1.msra.mxu0 0.0
    %412 = vmatprep.subr.mxu0 0.0
    %413 = vmatpush1.msra.mxu0 0.0
    %414 = vmatprep.subr.mxu0 0.0
    %415 = vmatpush1.msra.mxu0 0.0
    %416 = vmatprep.subr.mxu0 0.0
    %417 = vmatpush1.msra.mxu0 0.0
    %418 = vmatprep.subr.mxu0 0.0
    %419 = vmatpush1.msra.mxu0 0.0
    %420 = vmatprep.subr.mxu0 0.0
    %421 = vmatpush1.msra.mxu0 0.0
    %422 = vmatprep.subr.mxu0 0.0
    %423 = vmatpush1.msra.mxu0 0.0
    %424 = vmatprep.subr.mxu0 0.0
    %425 = vmatpush1.msra.mxu0 0.0
    %426 = vmatprep.subr.mxu0 0.0
    %427 = vmatpush1.msra.mxu0 0.0
    %428 = vmatprep.mubr.f32.mxu0 0.0
    %429 = vmatmul.mubr.f32.gmra.mrb[0].mxu0 %v340
    %v430 = vpop.f32.mrb[0].mxu0
    %v431 = vadd.f32 %v362, %v430
    %v432 = vpop.f32.mrb[0].mxu0
    %433 = vdwg.mxu0
    %434 = vst [vmem:[#allocation10] sm:$0xff] %v431
    %vm435 = vcmp.lt.s32.totalorder %v97, 5
    %v436 = vsel %vm435, 1, 0
    %vm437 = vcmp.eq.s32.totalorder %v436, 1
    %v438 = vsel %vm437, %v431, -inf
    %439 = vmax.xlane.f32.xlu0 %v438
    %v440 = vpop.xlane.xlu0 %439
    %v441 = vsub.f32 %v431, %v440
    %v442 = vmul.f32 %v441, 1.442695
    %v443 = vpow.pop %v442
    %v444 = vsel %vm437, %v443, 0.0
    %445 = vadd.xlane.f32.xlu0 %v444
    %v446 = vpop.xlane.xlu0 %445
    %v447 = vlog2.pop %v446
    %v448 = vmul.f32 %v447, 0.6931472
    %v449 = vsub.f32 %v441, %v448
    %450 = vst [vmem:[#allocation11] sm:$0xff] %v449
    // Predicated region
    $region62: #{tpu_custom_call.1} parent=1 // pred_check
      _
    $region63: #{tpu_custom_call.1} parent=1 // pred_check_branch
      %452 = sbr.rel (0) target = $region65
    $region64: #{tpu_custom_call.1} parent=1 // pred_region
      %s454 = ssub.s32 128, 128
      %455 = vsyncadd [#allocation4], %s454
      %s457 = sshll.u32 [#allocation10], 4
      %s458 = int_to_ptr.vmem [resolvable:$true] %s457
      %460 = dma.vmem_to_hbm [thread:$0]  %s458, 128, %s11, [#allocation4]
    $region65: #{tpu_custom_call.1} parent=1 // pred_fallthru
      _
    // Predicated region
    $region66: #{tpu_custom_call.1} parent=1 // pred_check
      _
    $region67: #{tpu_custom_call.1} parent=1 // pred_check_branch
      %462 = sbr.rel (0) target = $region69
    $region68: #{tpu_custom_call.1} parent=1 // pred_region
      %s464 = ssub.s32 128, 128
      %465 = vsyncadd [#allocation12], %s464
      %s467 = sshll.u32 [#allocation11], 4
      %s468 = int_to_ptr.vmem [resolvable:$true] %s467
      %470 = dma.vmem_to_hbm [thread:$0]  %s468, 128, %s12, [#allocation12]
    $region69: #{tpu_custom_call.1} parent=1 // pred_fallthru
      _
    // Predicated region
    $region70: #{tpu_custom_call.1} parent=1 // pred_check
      _
    $region71: #{tpu_custom_call.1} parent=1 // pred_check_branch
      %472 = sbr.rel (0) target = $region73
    $region72: #{tpu_custom_call.1} parent=1 // pred_region
      %473 = dma.done [#allocation4], 128
    $region73: #{tpu_custom_call.1} parent=1 // pred_fallthru
      _
    // Predicated region
    $region74: #{tpu_custom_call.1} parent=1 // pred_check
      _
    $region75: #{tpu_custom_call.1} parent=1 // pred_check_branch
      %475 = sbr.rel (0) target = $region77
    $region76: #{tpu_custom_call.1} parent=1 // pred_region
      %476 = dma.done [#allocation12], 128
    $region77: #{tpu_custom_call.1} parent=1 // pred_fallthru
      _
    %477 = vsyncpa [#allocation3], 1
    %478 = vsyncpa [#allocation6], 1
    %479 = vsyncpa [#allocation9], 1
    %480 = vsyncpa [#allocation4], 1
    %481 = vsyncpa [#allocation12], 1

</llo_original>
